<compile_context>
chip_gen: v6e
topology: v6e:2x2x1
jax: 0.10.0
libtpu: 0.0.40
codegen_flags: <defaults>
</compile_context>

<pallas_src>
import functools

import jax
import jax.numpy as jnp
import numpy as np
from jax import lax
from jax.experimental import pallas as pl
from jax.experimental.pallas import tpu as pltpu


def convlstm_kernel(p_ref, w_ref, gamma_ref, beta_ref, c_ref,
                    h_out_ref, c_out_ref, *, N, WW, H, eps):
    # ---- Conv2d (+bias, folded into the weight) for the WHOLE batch:
    #      (4H, Kpad) @ (Kpad, N*WW) -> (4H, N*WW), f32 accumulation on MXU.
    y_all = jnp.dot(w_ref[...], p_ref[...],
                    preferred_element_type=jnp.float32)       # (4H, N*WW) f32

    gamma = gamma_ref[...]                                     # (4H, WW) f32
    beta = beta_ref[...]                                       # (4H, WW) f32
    inv_count = 1.0 / float(4 * H * WW)

    # Static (unrolled) loop over the batch; N is small and all per-sample
    # slices below are aligned to (8,128) tiles (WW is a multiple of 128,
    # H a multiple of 8 at these shapes).
    for n in range(N):
        y = y_all[:, n * WW:(n + 1) * WW]                      # (4H, WW)

        # ---- LayerNorm over the full (4H, W, W) slab of this sample ----
        # single reduction pass: sum + sum-of-squares.
        s = jnp.sum(y)
        s2 = jnp.sum(y * y)
        mean = s * inv_count
        var = s2 * inv_count - mean * mean
        yn = (y - mean) * lax.rsqrt(var + eps)
        yn = yn * gamma + beta                                 # (4H, WW)

        # ---- LSTM gates (torch.split order: i, f, o, g), lane-dense ----
        cc_i = yn[0 * H:1 * H, :]
        cc_f = yn[1 * H:2 * H, :]
        cc_o = yn[2 * H:3 * H, :]
        cc_g = yn[3 * H:4 * H, :]

        i = jax.nn.sigmoid(cc_i)
        f = jax.nn.sigmoid(cc_f)
        o = jax.nn.sigmoid(cc_o)
        g = jnp.tanh(cc_g)

        c_prev = c_ref[n]                                      # (H, WW) f32
        c_next = f * c_prev + i * g
        h_next = o * jnp.tanh(c_next)

        c_out_ref[n] = c_next                                  # dense 256-lane stores
        h_out_ref[n] = h_next


def convlstm_cell(x_t, h_t, c_t, weight, bias, gamma, beta, *,
                  filter_size, eps=1e-5, mxu_dtype=jnp.bfloat16):
    """Forward of ConvLSTMCell.  Inputs are NCHW float32, like the PyTorch module."""
    N, Cin, W, _ = x_t.shape
    H = h_t.shape[1]
    C = Cin + H
    K = filter_size
    pad = K // 2
    WW = W * W
    KKC = K * K * C
    # contraction dim padded to a multiple of 128 (+1 "ones" row for the bias)
    Kpad = ((KKC + 1 + 127) // 128) * 128

    # ---------------- wrapper-side glue (plain JAX / XLA) ----------------
    # im2col: patches[(dy*K+dx)*C + c, n*WW + y*W + x] = padded[n, c, y+dy, x+dx]
    combined = jnp.concatenate([x_t, h_t], axis=1)             # (N, C, W, W)
    xp = jnp.pad(combined, ((0, 0), (0, 0), (pad, pad), (pad, pad)))
    taps = []
    for dy in range(K):
        for dx in range(K):
            taps.append(xp[:, :, dy:dy + W, dx:dx + W])        # (N, C, W, W)
    patches = jnp.stack(taps, axis=1)                          # (N, K*K, C, W, W)
    patches = patches.reshape(N, KKC, WW)
    patches = jnp.transpose(patches, (1, 0, 2)).reshape(KKC, N * WW)
    # extra row of ones (carries the conv bias) + zero padding up to Kpad
    patches = jnp.concatenate(
        [patches,
         jnp.ones((1, N * WW), patches.dtype),
         jnp.zeros((Kpad - KKC - 1, N * WW), patches.dtype)], axis=0)

    # weight (4H, C, K, K) -> (4H, K*K*C) with matching (dy*K+dx)*C + c order;
    # bias folded into the extra column matching the "ones" patch row.
    wT = jnp.transpose(weight, (0, 2, 3, 1)).reshape(4 * H, KKC)
    wT = jnp.concatenate(
        [wT, bias.reshape(4 * H, 1),
         jnp.zeros((4 * H, Kpad - KKC - 1), wT.dtype)], axis=1)  # (4H, Kpad)

    # bf16 MXU operands (f32 accumulation inside the kernel); LN/gating stay f32.
    patches = patches.astype(mxu_dtype)
    wT = wT.astype(mxu_dtype)

    gma = gamma.reshape(4 * H, WW).astype(jnp.float32)
    bta = beta.reshape(4 * H, WW).astype(jnp.float32)
    c_flat = c_t.reshape(N, H, WW).astype(jnp.float32)

    kernel = functools.partial(convlstm_kernel, N=N, WW=WW, H=H, eps=eps)

    # Single grid step: whole batch per invocation (all operands << 1 MiB, so
    # double-buffering of the grid-invariant constants is moot).
    h_out, c_out = pl.pallas_call(
        kernel,
        out_shape=(jax.ShapeDtypeStruct((N, H, WW), jnp.float32),
                   jax.ShapeDtypeStruct((N, H, WW), jnp.float32)),
        grid_spec=pltpu.PrefetchScalarGridSpec(
            num_scalar_prefetch=0,
            grid=(1,),
            in_specs=[
                pl.BlockSpec((Kpad, N * WW), lambda i: (0, 0)),   # im2col patches (bf16)
                pl.BlockSpec((4 * H, Kpad), lambda i: (0, 0)),    # conv weight+bias (bf16)
                pl.BlockSpec((4 * H, WW), lambda i: (0, 0)),      # LN gamma
                pl.BlockSpec((4 * H, WW), lambda i: (0, 0)),      # LN beta
                pl.BlockSpec((N, H, WW), lambda i: (0, 0, 0)),    # c_t
            ],
            out_specs=[
                pl.BlockSpec((N, H, WW), lambda i: (0, 0, 0)),    # h_next
                pl.BlockSpec((N, H, WW), lambda i: (0, 0, 0)),    # c_next
            ],
        ),
        compiler_params=pltpu.CompilerParams(
            dimension_semantics=("arbitrary",)),
    )(patches, wT, gma, bta, c_flat)

    h_next = h_out.reshape(N, H, W, W)
    c_next = c_out.reshape(N, H, W, W)
    return h_next, c_next


def ref_forward(x_t, h_t, c_t, weight, bias, gamma, beta, filter_size,
                eps=1e-5, conv_dtype=jnp.float32):
    """Pure-JAX reference (mirrors the PyTorch module exactly)."""
    pad = filter_size // 2
    combined = jnp.concatenate([x_t, h_t], axis=1)
    conv = lax.conv_general_dilated(
        combined.astype(conv_dtype), weight.astype(conv_dtype),
        window_strides=(1, 1), padding=((pad, pad), (pad, pad)),
        dimension_numbers=('NCHW', 'OIHW', 'NCHW'),
        preferred_element_type=jnp.float32)
    conv = conv + bias[None, :, None, None].astype(jnp.float32)
    mean = jnp.mean(conv, axis=(1, 2, 3), keepdims=True)
    var = jnp.var(conv, axis=(1, 2, 3), keepdims=True)
    y = (conv - mean) / jnp.sqrt(var + eps) * gamma[None] + beta[None]
    cc_i, cc_f, cc_o, cc_g = jnp.split(y, 4, axis=1)
    i = jax.nn.sigmoid(cc_i)
    f = jax.nn.sigmoid(cc_f)
    o = jax.nn.sigmoid(cc_o)
    g = jnp.tanh(cc_g)
    c_next = f * c_t + i * g
    h_next = o * jnp.tanh(c_next)
    return h_next, c_next


if __name__ == "__main__":
    # small shapes consistent with the module's forward
    N, Cin, Hh, Wd, K = 2, 4, 8, 16, 3      # batch, in_channel, num_hidden, width, filter
    key = jax.random.PRNGKey(0)
    ks = jax.random.split(key, 7)

    x_t = jax.random.normal(ks[0], (N, Cin, Wd, Wd), jnp.float32)
    h_t = jax.random.normal(ks[1], (N, Hh, Wd, Wd), jnp.float32)
    c_t = jax.random.normal(ks[2], (N, Hh, Wd, Wd), jnp.float32)

    # deterministic synthetic parameters (Conv2d + LayerNorm of the nn.Sequential)
    weight = 0.1 * jax.random.normal(ks[3], (4 * Hh, Cin + Hh, K, K), jnp.float32)
    bias = 0.1 * jax.random.normal(ks[4], (4 * Hh,), jnp.float32)
    gamma = 1.0 + 0.1 * jax.random.normal(ks[5], (4 * Hh, Wd, Wd), jnp.float32)
    beta = 0.1 * jax.random.normal(ks[6], (4 * Hh, Wd, Wd), jnp.float32)

    # --- fast path: bf16 MXU operands, checked against f32 reference -------
    h_next, c_next = convlstm_cell(x_t, h_t, c_t, weight, bias, gamma, beta,
                                   filter_size=K, mxu_dtype=jnp.bfloat16)
    jax.block_until_ready((h_next, c_next))

    h_ref, c_ref = ref_forward(x_t, h_t, c_t, weight, bias, gamma, beta, K)
    assert h_next.shape == (N, Hh, Wd, Wd) and c_next.shape == (N, Hh, Wd, Wd)
    assert np.allclose(np.asarray(h_next), np.asarray(h_ref), atol=2e-2, rtol=2e-2)
    assert np.allclose(np.asarray(c_next), np.asarray(c_ref), atol=2e-2, rtol=2e-2)

    # --- exactness check: f32 MXU operands against f32 reference -----------
    h32, c32 = convlstm_cell(x_t, h_t, c_t, weight, bias, gamma, beta,
                             filter_size=K, mxu_dtype=jnp.float32)
    jax.block_until_ready((h32, c32))
    assert np.allclose(np.asarray(h32), np.asarray(h_ref), atol=2e-3, rtol=2e-3)
    assert np.allclose(np.asarray(c32), np.asarray(c_ref), atol=2e-3, rtol=2e-3)

    print("KERNEL_OK")
</pallas_src>

<mosaic_0001>
module attributes {stable_mosaic.version = 11 : i64} {
  func.func @convlstm_kernel(%arg0: i32, %arg1: memref<128x512xbf16, #tpu.memory_space<vmem>>, %arg2: memref<32x128xbf16, #tpu.memory_space<vmem>>, %arg3: memref<32x256xf32, #tpu.memory_space<vmem>>, %arg4: memref<32x256xf32, #tpu.memory_space<vmem>>, %arg5: memref<2x8x256xf32, #tpu.memory_space<vmem>>, %arg6: memref<2x8x256xf32, #tpu.memory_space<vmem>>, %arg7: memref<2x8x256xf32, #tpu.memory_space<vmem>>) attributes {dimension_semantics = [#tpu.dimension_semantics<arbitrary>], iteration_bounds = array<i64: 1>, scalar_prefetch = 0 : i64, scratch_operands = 0 : i64, tpu.core_type = #tpu.core_type<tc>, window_params = [{pipeline_mode = #tpu.pipeline_mode<synchronous>, transform_indices = @transform_0, window_bounds = array<i64: 128, 512>}, {pipeline_mode = #tpu.pipeline_mode<synchronous>, transform_indices = @transform_1, window_bounds = array<i64: 32, 128>}, {pipeline_mode = #tpu.pipeline_mode<synchronous>, transform_indices = @transform_2, window_bounds = array<i64: 32, 256>}, {pipeline_mode = #tpu.pipeline_mode<synchronous>, transform_indices = @transform_3, window_bounds = array<i64: 32, 256>}, {pipeline_mode = #tpu.pipeline_mode<synchronous>, transform_indices = @transform_4, window_bounds = array<i64: 2, 8, 256>}, {pipeline_mode = #tpu.pipeline_mode<synchronous>, transform_indices = @transform_5, window_bounds = array<i64: 2, 8, 256>}, {pipeline_mode = #tpu.pipeline_mode<synchronous>, transform_indices = @transform_6, window_bounds = array<i64: 2, 8, 256>}]} {
    %c0 = arith.constant 0 : index
    %c0_0 = arith.constant 0 : index
    %0 = vector.load %arg2[%c0, %c0_0] : memref<32x128xbf16, #tpu.memory_space<vmem>>, vector<32x128xbf16>
    %c0_1 = arith.constant 0 : index
    %c0_2 = arith.constant 0 : index
    %1 = vector.load %arg1[%c0_1, %c0_2] : memref<128x512xbf16, #tpu.memory_space<vmem>>, vector<128x512xbf16>
    %cst = arith.constant dense<0.000000e+00> : vector<32x512xf32>
    %2 = tpu.matmul %0, %1, %cst {dimension_numbers = #tpu.dot_dimension_numbers<[1], [0], [0], [1], [0, 0, 1, 1], [], []>} : vector<32x128xbf16>, vector<128x512xbf16>, vector<32x512xf32> -> vector<32x512xf32>
    %c0_3 = arith.constant 0 : index
    %c0_4 = arith.constant 0 : index
    %3 = vector.load %arg3[%c0_3, %c0_4] : memref<32x256xf32, #tpu.memory_space<vmem>>, vector<32x256xf32>
    %c0_5 = arith.constant 0 : index
    %c0_6 = arith.constant 0 : index
    %4 = vector.load %arg4[%c0_5, %c0_6] : memref<32x256xf32, #tpu.memory_space<vmem>>, vector<32x256xf32>
    %5 = vector.extract_strided_slice %2 {offsets = [0, 0], sizes = [32, 256], strides = [1, 1]} : vector<32x512xf32> to vector<32x256xf32>
    %6 = vector.shape_cast %5 : vector<32x256xf32> to vector<1x32x256xf32>
    %cst_7 = arith.constant dense<0.000000e+00> : vector<1xf32>
    %7 = vector.multi_reduction <add>, %6, %cst_7 [1, 2] : vector<1x32x256xf32> to vector<1xf32>
    %8 = vector.shape_cast %7 : vector<1xf32> to vector<1x1x1xf32>
    %9 = vector.extract %8[0, 0, 0] : f32 from vector<1x1x1xf32>
    %10 = arith.mulf %5, %5 : vector<32x256xf32>
    %11 = vector.shape_cast %10 : vector<32x256xf32> to vector<1x32x256xf32>
    %cst_8 = arith.constant dense<0.000000e+00> : vector<1xf32>
    %12 = vector.multi_reduction <add>, %11, %cst_8 [1, 2] : vector<1x32x256xf32> to vector<1xf32>
    %13 = vector.shape_cast %12 : vector<1xf32> to vector<1x1x1xf32>
    %14 = vector.extract %13[0, 0, 0] : f32 from vector<1x1x1xf32>
    %cst_9 = arith.constant 1.22070313E-4 : f32
    %15 = arith.mulf %9, %cst_9 : f32
    %cst_10 = arith.constant 1.22070313E-4 : f32
    %16 = arith.mulf %14, %cst_10 : f32
    %17 = arith.mulf %15, %15 : f32
    %18 = arith.subf %16, %17 : f32
    %19 = vector.broadcast %15 : f32 to vector<32x256xf32>
    %20 = arith.subf %5, %19 : vector<32x256xf32>
    %cst_11 = arith.constant 9.99999974E-6 : f32
    %21 = arith.addf %18, %cst_11 : f32
    %22 = math.rsqrt %21 : f32
    %23 = vector.broadcast %22 : f32 to vector<32x256xf32>
    %24 = arith.mulf %20, %23 : vector<32x256xf32>
    %25 = arith.mulf %24, %3 : vector<32x256xf32>
    %26 = arith.addf %25, %4 : vector<32x256xf32>
    %27 = vector.extract_strided_slice %26 {offsets = [0, 0], sizes = [8, 256], strides = [1, 1]} : vector<32x256xf32> to vector<8x256xf32>
    %28 = vector.extract_strided_slice %26 {offsets = [8, 0], sizes = [8, 256], strides = [1, 1]} : vector<32x256xf32> to vector<8x256xf32>
    %29 = vector.extract_strided_slice %26 {offsets = [16, 0], sizes = [8, 256], strides = [1, 1]} : vector<32x256xf32> to vector<8x256xf32>
    %30 = vector.extract_strided_slice %26 {offsets = [24, 0], sizes = [8, 256], strides = [1, 1]} : vector<32x256xf32> to vector<8x256xf32>
    %31 = arith.negf %27 : vector<8x256xf32>
    %32 = math.exp %31 : vector<8x256xf32>
    %cst_12 = arith.constant 1.000000e+00 : f32
    %33 = vector.broadcast %cst_12 : f32 to vector<8x256xf32>
    %34 = arith.addf %33, %32 : vector<8x256xf32>
    %35 = arith.divf %33, %34 : vector<8x256xf32>
    %36 = arith.negf %28 : vector<8x256xf32>
    %37 = math.exp %36 : vector<8x256xf32>
    %cst_13 = arith.constant 1.000000e+00 : f32
    %38 = vector.broadcast %cst_13 : f32 to vector<8x256xf32>
    %39 = arith.addf %38, %37 : vector<8x256xf32>
    %40 = arith.divf %38, %39 : vector<8x256xf32>
    %41 = arith.negf %29 : vector<8x256xf32>
    %42 = math.exp %41 : vector<8x256xf32>
    %cst_14 = arith.constant 1.000000e+00 : f32
    %43 = vector.broadcast %cst_14 : f32 to vector<8x256xf32>
    %44 = arith.addf %43, %42 : vector<8x256xf32>
    %45 = arith.divf %43, %44 : vector<8x256xf32>
    %46 = math.tanh %30 : vector<8x256xf32>
    %c0_15 = arith.constant 0 : index
    %c0_16 = arith.constant 0 : index
    %c0_17 = arith.constant 0 : index
    %47 = vector.load %arg5[%c0_15, %c0_16, %c0_17] : memref<2x8x256xf32, #tpu.memory_space<vmem>>, vector<1x8x256xf32>
    %48 = vector.shape_cast %47 : vector<1x8x256xf32> to vector<8x256xf32>
    %49 = arith.mulf %40, %48 : vector<8x256xf32>
    %50 = arith.mulf %35, %46 : vector<8x256xf32>
    %51 = arith.addf %49, %50 : vector<8x256xf32>
    %52 = math.tanh %51 : vector<8x256xf32>
    %53 = arith.mulf %45, %52 : vector<8x256xf32>
    %c0_18 = arith.constant 0 : index
    %c0_19 = arith.constant 0 : index
    %c0_20 = arith.constant 0 : index
    %54 = vector.load %arg7[%c0_18, %c0_19, %c0_20] : memref<2x8x256xf32, #tpu.memory_space<vmem>>, vector<1x8x256xf32>
    %55 = vector.shape_cast %54 : vector<1x8x256xf32> to vector<8x256xf32>
    %56 = vector.shape_cast %51 : vector<8x256xf32> to vector<1x8x256xf32>
    tpu.vector_store %arg7[%c0_18, %c0_19, %c0_20], %56 {strides = array<i32>} : memref<2x8x256xf32, #tpu.memory_space<vmem>>, vector<1x8x256xf32>,
    %c0_21 = arith.constant 0 : index
    %c0_22 = arith.constant 0 : index
    %c0_23 = arith.constant 0 : index
    %57 = vector.load %arg6[%c0_21, %c0_22, %c0_23] : memref<2x8x256xf32, #tpu.memory_space<vmem>>, vector<1x8x256xf32>
    %58 = vector.shape_cast %57 : vector<1x8x256xf32> to vector<8x256xf32>
    %59 = vector.shape_cast %53 : vector<8x256xf32> to vector<1x8x256xf32>
    tpu.vector_store %arg6[%c0_21, %c0_22, %c0_23], %59 {strides = array<i32>} : memref<2x8x256xf32, #tpu.memory_space<vmem>>, vector<1x8x256xf32>,
    %60 = vector.extract_strided_slice %2 {offsets = [0, 256], sizes = [32, 256], strides = [1, 1]} : vector<32x512xf32> to vector<32x256xf32>
    %61 = vector.shape_cast %60 : vector<32x256xf32> to vector<1x32x256xf32>
    %cst_24 = arith.constant dense<0.000000e+00> : vector<1xf32>
    %62 = vector.multi_reduction <add>, %61, %cst_24 [1, 2] : vector<1x32x256xf32> to vector<1xf32>
    %63 = vector.shape_cast %62 : vector<1xf32> to vector<1x1x1xf32>
    %64 = vector.extract %63[0, 0, 0] : f32 from vector<1x1x1xf32>
    %65 = arith.mulf %60, %60 : vector<32x256xf32>
    %66 = vector.shape_cast %65 : vector<32x256xf32> to vector<1x32x256xf32>
    %cst_25 = arith.constant dense<0.000000e+00> : vector<1xf32>
    %67 = vector.multi_reduction <add>, %66, %cst_25 [1, 2] : vector<1x32x256xf32> to vector<1xf32>
    %68 = vector.shape_cast %67 : vector<1xf32> to vector<1x1x1xf32>
    %69 = vector.extract %68[0, 0, 0] : f32 from vector<1x1x1xf32>
    %cst_26 = arith.constant 1.22070313E-4 : f32
    %70 = arith.mulf %64, %cst_26 : f32
    %cst_27 = arith.constant 1.22070313E-4 : f32
    %71 = arith.mulf %69, %cst_27 : f32
    %72 = arith.mulf %70, %70 : f32
    %73 = arith.subf %71, %72 : f32
    %74 = vector.broadcast %70 : f32 to vector<32x256xf32>
    %75 = arith.subf %60, %74 : vector<32x256xf32>
    %cst_28 = arith.constant 9.99999974E-6 : f32
    %76 = arith.addf %73, %cst_28 : f32
    %77 = math.rsqrt %76 : f32
    %78 = vector.broadcast %77 : f32 to vector<32x256xf32>
    %79 = arith.mulf %75, %78 : vector<32x256xf32>
    %80 = arith.mulf %79, %3 : vector<32x256xf32>
    %81 = arith.addf %80, %4 : vector<32x256xf32>
    %82 = vector.extract_strided_slice %81 {offsets = [0, 0], sizes = [8, 256], strides = [1, 1]} : vector<32x256xf32> to vector<8x256xf32>
    %83 = vector.extract_strided_slice %81 {offsets = [8, 0], sizes = [8, 256], strides = [1, 1]} : vector<32x256xf32> to vector<8x256xf32>
    %84 = vector.extract_strided_slice %81 {offsets = [16, 0], sizes = [8, 256], strides = [1, 1]} : vector<32x256xf32> to vector<8x256xf32>
    %85 = vector.extract_strided_slice %81 {offsets = [24, 0], sizes = [8, 256], strides = [1, 1]} : vector<32x256xf32> to vector<8x256xf32>
    %86 = arith.negf %82 : vector<8x256xf32>
    %87 = math.exp %86 : vector<8x256xf32>
    %cst_29 = arith.constant 1.000000e+00 : f32
    %88 = vector.broadcast %cst_29 : f32 to vector<8x256xf32>
    %89 = arith.addf %88, %87 : vector<8x256xf32>
    %90 = arith.divf %88, %89 : vector<8x256xf32>
    %91 = arith.negf %83 : vector<8x256xf32>
    %92 = math.exp %91 : vector<8x256xf32>
    %cst_30 = arith.constant 1.000000e+00 : f32
    %93 = vector.broadcast %cst_30 : f32 to vector<8x256xf32>
    %94 = arith.addf %93, %92 : vector<8x256xf32>
    %95 = arith.divf %93, %94 : vector<8x256xf32>
    %96 = arith.negf %84 : vector<8x256xf32>
    %97 = math.exp %96 : vector<8x256xf32>
    %cst_31 = arith.constant 1.000000e+00 : f32
    %98 = vector.broadcast %cst_31 : f32 to vector<8x256xf32>
    %99 = arith.addf %98, %97 : vector<8x256xf32>
    %100 = arith.divf %98, %99 : vector<8x256xf32>
    %101 = math.tanh %85 : vector<8x256xf32>
    %c1 = arith.constant 1 : index
    %c0_32 = arith.constant 0 : index
    %c0_33 = arith.constant 0 : index
    %102 = vector.load %arg5[%c1, %c0_32, %c0_33] : memref<2x8x256xf32, #tpu.memory_space<vmem>>, vector<1x8x256xf32>
    %103 = vector.shape_cast %102 : vector<1x8x256xf32> to vector<8x256xf32>
    %104 = arith.mulf %95, %103 : vector<8x256xf32>
    %105 = arith.mulf %90, %101 : vector<8x256xf32>
    %106 = arith.addf %104, %105 : vector<8x256xf32>
    %107 = math.tanh %106 : vector<8x256xf32>
    %108 = arith.mulf %100, %107 : vector<8x256xf32>
    %c1_34 = arith.constant 1 : index
    %c0_35 = arith.constant 0 : index
    %c0_36 = arith.constant 0 : index
    %109 = vector.load %arg7[%c1_34, %c0_35, %c0_36] : memref<2x8x256xf32, #tpu.memory_space<vmem>>, vector<1x8x256xf32>
    %110 = vector.shape_cast %109 : vector<1x8x256xf32> to vector<8x256xf32>
    %111 = vector.shape_cast %106 : vector<8x256xf32> to vector<1x8x256xf32>
    tpu.vector_store %arg7[%c1_34, %c0_35, %c0_36], %111 {strides = array<i32>} : memref<2x8x256xf32, #tpu.memory_space<vmem>>, vector<1x8x256xf32>,
    %c1_37 = arith.constant 1 : index
    %c0_38 = arith.constant 0 : index
    %c0_39 = arith.constant 0 : index
    %112 = vector.load %arg6[%c1_37, %c0_38, %c0_39] : memref<2x8x256xf32, #tpu.memory_space<vmem>>, vector<1x8x256xf32>
    %113 = vector.shape_cast %112 : vector<1x8x256xf32> to vector<8x256xf32>
    %114 = vector.shape_cast %108 : vector<8x256xf32> to vector<1x8x256xf32>
    tpu.vector_store %arg6[%c1_37, %c0_38, %c0_39], %114 {strides = array<i32>} : memref<2x8x256xf32, #tpu.memory_space<vmem>>, vector<1x8x256xf32>,
    return
  }
  func.func @transform_0(%arg0: i32) -> (i32, i32) {
    %c0_i32 = arith.constant 0 : i32
    %c0_i32_0 = arith.constant 0 : i32
    %c0_i32_1 = arith.constant 0 : i32
    return %c0_i32, %c0_i32_0 : i32, i32
  }
  func.func @transform_1(%arg0: i32) -> (i32, i32) {
    %c0_i32 = arith.constant 0 : i32
    %c0_i32_0 = arith.constant 0 : i32
    %c0_i32_1 = arith.constant 0 : i32
    return %c0_i32, %c0_i32_0 : i32, i32
  }
  func.func @transform_2(%arg0: i32) -> (i32, i32) {
    %c0_i32 = arith.constant 0 : i32
    %c0_i32_0 = arith.constant 0 : i32
    %c0_i32_1 = arith.constant 0 : i32
    return %c0_i32, %c0_i32_0 : i32, i32
  }
  func.func @transform_3(%arg0: i32) -> (i32, i32) {
    %c0_i32 = arith.constant 0 : i32
    %c0_i32_0 = arith.constant 0 : i32
    %c0_i32_1 = arith.constant 0 : i32
    return %c0_i32, %c0_i32_0 : i32, i32
  }
  func.func @transform_4(%arg0: i32) -> (i32, i32, i32) {
    %c0_i32 = arith.constant 0 : i32
    %c0_i32_0 = arith.constant 0 : i32
    %c0_i32_1 = arith.constant 0 : i32
    %c0_i32_2 = arith.constant 0 : i32
    return %c0_i32, %c0_i32_0, %c0_i32_1 : i32, i32, i32
  }
  func.func @transform_5(%arg0: i32) -> (i32, i32, i32) {
    %c0_i32 = arith.constant 0 : i32
    %c0_i32_0 = arith.constant 0 : i32
    %c0_i32_1 = arith.constant 0 : i32
    %c0_i32_2 = arith.constant 0 : i32
    return %c0_i32, %c0_i32_0, %c0_i32_1 : i32, i32, i32
  }
  func.func @transform_6(%arg0: i32) -> (i32, i32, i32) {
    %c0_i32 = arith.constant 0 : i32
    %c0_i32_0 = arith.constant 0 : i32
    %c0_i32_1 = arith.constant 0 : i32
    %c0_i32_2 = arith.constant 0 : i32
    return %c0_i32, %c0_i32_0, %c0_i32_1 : i32, i32, i32
  }
}

</mosaic_0001>

<llo_original>
// kernel: tpu_custom_call.1
$region0: #{tpu_custom_call.1}
  #allocation0 [shape = 'u32[]', space=smem, size = 0x4, offset = 0x4, fixed_abs, tag = 'smem constant byte address 0x4 - core index']
  #allocation1 [shape = 'u32[144,128]{1,0:T(1,128)}', space=vmem, size = 0x12000, scoped, tag = 'internal scratch']
  %s0 = inlined_call_operand.hbm [shape: bf16[128,512], index: 0, kind: input, shape index: {}]
  %s1 = inlined_call_operand.hbm [shape: bf16[32,128], index: 1, kind: input, shape index: {}]
  %s2 = inlined_call_operand.hbm [shape: f32[32,256], index: 2, kind: input, shape index: {}]
  %s3 = inlined_call_operand.hbm [shape: f32[32,256], index: 3, kind: input, shape index: {}]
  %s4 = inlined_call_operand.hbm [shape: f32[2,8,256], index: 4, kind: input, shape index: {}]
  %s5 = inlined_call_operand.hbm [shape: f32[2,8,256], index: 5, kind: output, shape index: {0}]
  %s6 = inlined_call_operand.hbm [shape: f32[2,8,256], index: 6, kind: output, shape index: {1}]
  %7 = xla_tuple %s5, %s6
  %s8 = sld [smem:[#allocation0]]
  $region58: #{tpu_custom_call.1} parent=0
    _
  %s10 = ssub.s32 1, %s8
  %s11 = scalar_select 0, %s10, %s8
  $region1: #{tpu_custom_call.1} parent=0
    #allocation2 [shape = 'u8[131072]{0}', space=vmem, size = 0x20000, scoped, tag = 'input window, operand 0, single buffered']
    #allocation3 [shape = 's32[1]{0}', space=sflag, size = 0x4, scoped, tag = 'scoped memory for tpu_custom_call.1']
    #allocation4 [shape = 's32[1]{0}', space=sflag, size = 0x4, scoped, tag = 'scoped memory for tpu_custom_call.1']
    #allocation5 [shape = 'u8[8192]{0}', space=vmem, size = 0x2000, scoped, tag = 'input window, operand 1, single buffered']
    #allocation6 [shape = 's32[1]{0}', space=sflag, size = 0x4, scoped, tag = 'scoped memory for tpu_custom_call.1']
    #allocation7 [shape = 'u8[32768]{0}', space=vmem, size = 0x8000, scoped, tag = 'input window, operand 2, single buffered']
    #allocation8 [shape = 'u8[32768]{0}', space=vmem, size = 0x8000, scoped, tag = 'input window, operand 3, single buffered']
    #allocation9 [shape = 's32[1]{0}', space=sflag, size = 0x4, scoped, tag = 'scoped memory for tpu_custom_call.1']
    #allocation10 [shape = 'u8[16384]{0}', space=vmem, size = 0x4000, scoped, tag = 'input window, operand 4, single buffered']
    #allocation11 [shape = 'u8[16384]{0}', space=vmem, size = 0x4000, scoped, tag = 'output window, operand 0, single buffered']
    #allocation12 [shape = 'u8[16384]{0}', space=vmem, size = 0x4000, scoped, tag = 'output window, operand 1, single buffered']
    #allocation13 [shape = 's32[1]{0}', space=sflag, size = 0x4, scoped, tag = 'scoped memory for tpu_custom_call.1']
    %12 = vsyncpa [#allocation3], 0
    %13 = vsyncpa [#allocation6], 0
    %14 = vsyncpa [#allocation9], 0
    %15 = vsyncpa [#allocation4], 0
    %16 = vsyncpa [#allocation13], 0
    // Predicated region
    $region2: #{tpu_custom_call.1} parent=1 // pred_check
      _
    $region3: #{tpu_custom_call.1} parent=1 // pred_check_branch
      %18 = sbr.rel (0) target = $region5
    $region4: #{tpu_custom_call.1} parent=1 // pred_region
      %s20 = ssub.s32 4096, 4096
      %21 = vsyncadd [#allocation3], %s20
      %s22 = sshll.u32 [#allocation2], 4
      %s23 = int_to_ptr.vmem [resolvable:$true] %s22
      %28 = dma.hbm_to_vmem [thread:$0]  %s0, 4096, %s23, [#allocation3], 256, 256, 16
    $region5: #{tpu_custom_call.1} parent=1 // pred_fallthru
      _
    // Predicated region
    $region6: #{tpu_custom_call.1} parent=1 // pred_check
      _
    $region7: #{tpu_custom_call.1} parent=1 // pred_check_branch
      %30 = sbr.rel (0) target = $region9
    $region8: #{tpu_custom_call.1} parent=1 // pred_region
      %s32 = ssub.s32 256, 256
      %33 = vsyncadd [#allocation6], %s32
      %s34 = sshll.u32 [#allocation5], 4
      %s35 = int_to_ptr.vmem [resolvable:$true] %s34
      %40 = dma.hbm_to_vmem [thread:$0]  %s1, 256, %s35, [#allocation6], 64, 64, 4
    $region9: #{tpu_custom_call.1} parent=1 // pred_fallthru
      _
    // Predicated region
    $region10: #{tpu_custom_call.1} parent=1 // pred_check
      _
    $region11: #{tpu_custom_call.1} parent=1 // pred_check_branch
      %42 = sbr.rel (0) target = $region13
    $region12: #{tpu_custom_call.1} parent=1 // pred_region
      %s44 = ssub.s32 1024, 1024
      %45 = vsyncadd [#allocation6], %s44
      %s46 = sshll.u32 [#allocation7], 4
      %s47 = int_to_ptr.vmem [resolvable:$true] %s46
      %52 = dma.hbm_to_vmem [thread:$0]  %s2, 1024, %s47, [#allocation6], 256, 256, 16
    $region13: #{tpu_custom_call.1} parent=1 // pred_fallthru
      _
    // Predicated region
    $region14: #{tpu_custom_call.1} parent=1 // pred_check
      _
    $region15: #{tpu_custom_call.1} parent=1 // pred_check_branch
      %54 = sbr.rel (0) target = $region17
    $region16: #{tpu_custom_call.1} parent=1 // pred_region
      %s56 = ssub.s32 1024, 1024
      %57 = vsyncadd [#allocation9], %s56
      %s58 = sshll.u32 [#allocation8], 4
      %s59 = int_to_ptr.vmem [resolvable:$true] %s58
      %64 = dma.hbm_to_vmem [thread:$0]  %s3, 1024, %s59, [#allocation9], 256, 256, 16
    $region17: #{tpu_custom_call.1} parent=1 // pred_fallthru
      _
    // Predicated region
    $region18: #{tpu_custom_call.1} parent=1 // pred_check
      _
    $region19: #{tpu_custom_call.1} parent=1 // pred_check_branch
      %66 = sbr.rel (0) target = $region21
    $region20: #{tpu_custom_call.1} parent=1 // pred_region
      %s68 = ssub.s32 512, 512
      %69 = vsyncadd [#allocation9], %s68
      %s70 = sshll.u32 [#allocation10], 4
      %s71 = int_to_ptr.vmem [resolvable:$true] %s70
      %76 = dma.hbm_to_vmem [thread:$0]  %s4, 512, %s71, [#allocation9], 256, 256, 16
    $region21: #{tpu_custom_call.1} parent=1 // pred_fallthru
      _
    // Predicated region
    $region22: #{tpu_custom_call.1} parent=1 // pred_check
      _
    $region23: #{tpu_custom_call.1} parent=1 // pred_check_branch
      %78 = sbr.rel (0) target = $region25
    $region24: #{tpu_custom_call.1} parent=1 // pred_region
      %79 = dma.done [#allocation3], 4096
    $region25: #{tpu_custom_call.1} parent=1 // pred_fallthru
      _
    // Predicated region
    $region26: #{tpu_custom_call.1} parent=1 // pred_check
      _
    $region27: #{tpu_custom_call.1} parent=1 // pred_check_branch
      %81 = sbr.rel (0) target = $region29
    $region28: #{tpu_custom_call.1} parent=1 // pred_region
      %82 = dma.done [#allocation6], 256
    $region29: #{tpu_custom_call.1} parent=1 // pred_fallthru
      _
    // Predicated region
    $region30: #{tpu_custom_call.1} parent=1 // pred_check
      _
    $region31: #{tpu_custom_call.1} parent=1 // pred_check_branch
      %84 = sbr.rel (0) target = $region33
    $region32: #{tpu_custom_call.1} parent=1 // pred_region
      %85 = dma.done [#allocation6], 1024
    $region33: #{tpu_custom_call.1} parent=1 // pred_fallthru
      _
    // Predicated region
    $region34: #{tpu_custom_call.1} parent=1 // pred_check
      _
    $region35: #{tpu_custom_call.1} parent=1 // pred_check_branch
      %87 = sbr.rel (0) target = $region37
    $region36: #{tpu_custom_call.1} parent=1 // pred_region
      %88 = dma.done [#allocation9], 1024
    $region37: #{tpu_custom_call.1} parent=1 // pred_fallthru
      _
    // Predicated region
    $region38: #{tpu_custom_call.1} parent=1 // pred_check
      _
    $region39: #{tpu_custom_call.1} parent=1 // pred_check_branch
      %90 = sbr.rel (0) target = $region41
    $region40: #{tpu_custom_call.1} parent=1 // pred_region
      %91 = dma.done [#allocation9], 512
    $region41: #{tpu_custom_call.1} parent=1 // pred_fallthru
      _
    %v93 = vld [vmem:[#allocation5] sm:$0xf]
    %v94 = vld [vmem:[#allocation5 + $0x4] sm:$0xf]
    %v95 = vld [vmem:[#allocation5 + $0x8] sm:$0xf]
    %v96 = vld [vmem:[#allocation5 + $0xc] sm:$0xf]
    %v97 = vld [vmem:[#allocation2] sm:$0xff]
    %v98 = vld [vmem:[#allocation2 + $0x8] sm:$0xff]
    %v99 = vld [vmem:[#allocation2 + $0x10] sm:$0xff]
    %v100 = vld [vmem:[#allocation2 + $0x18] sm:$0xff]
    %v101 = vld [vmem:[#allocation2 + $0x20] sm:$0xff]
    %v102 = vld [vmem:[#allocation2 + $0x28] sm:$0xff]
    %v103 = vld [vmem:[#allocation2 + $0x30] sm:$0xff]
    %v104 = vld [vmem:[#allocation2 + $0x38] sm:$0xff]
    %v105 = vld [vmem:[#allocation2 + $0x40] sm:$0xff]
    %v106 = vld [vmem:[#allocation2 + $0x48] sm:$0xff]
    %v107 = vld [vmem:[#allocation2 + $0x50] sm:$0xff]
    %v108 = vld [vmem:[#allocation2 + $0x58] sm:$0xff]
    %v109 = vld [vmem:[#allocation2 + $0x60] sm:$0xff]
    %v110 = vld [vmem:[#allocation2 + $0x68] sm:$0xff]
    %v111 = vld [vmem:[#allocation2 + $0x70] sm:$0xff]
    %v112 = vld [vmem:[#allocation2 + $0x78] sm:$0xff]
    %v113 = vld [vmem:[#allocation2 + $0x80] sm:$0xff]
    %v114 = vld [vmem:[#allocation2 + $0x88] sm:$0xff]
    %v115 = vld [vmem:[#allocation2 + $0x90] sm:$0xff]
    %v116 = vld [vmem:[#allocation2 + $0x98] sm:$0xff]
    %v117 = vld [vmem:[#allocation2 + $0xa0] sm:$0xff]
    %v118 = vld [vmem:[#allocation2 + $0xa8] sm:$0xff]
    %v119 = vld [vmem:[#allocation2 + $0xb0] sm:$0xff]
    %v120 = vld [vmem:[#allocation2 + $0xb8] sm:$0xff]
    %v121 = vld [vmem:[#allocation2 + $0xc0] sm:$0xff]
    %v122 = vld [vmem:[#allocation2 + $0xc8] sm:$0xff]
    %v123 = vld [vmem:[#allocation2 + $0xd0] sm:$0xff]
    %v124 = vld [vmem:[#allocation2 + $0xd8] sm:$0xff]
    %v125 = vld [vmem:[#allocation2 + $0xe0] sm:$0xff]
    %v126 = vld [vmem:[#allocation2 + $0xe8] sm:$0xff]
    %v127 = vld [vmem:[#allocation2 + $0xf0] sm:$0xff]
    %v128 = vld [vmem:[#allocation2 + $0xf8] sm:$0xff]
    %v133 = vunpack.c.l.b16 %v93
    %v134 = vunpack.c.l.b16 %v94
    %v135 = vunpack.c.l.b16 %v95
    %v136 = vunpack.c.l.b16 %v96
    %v137 = vpack.c.b16 %v134, %v133
    %v138 = vpack.c.b16 %v136, %v135
    %v173 = vunpack.c.l.b16 %v97
    %v174 = vunpack.c.h.b16 %v97
    %v175 = vunpack.c.l.b16 %v98
    %v176 = vunpack.c.h.b16 %v98
    %v177 = vunpack.c.l.b16 %v99
    %v178 = vunpack.c.h.b16 %v99
    %v179 = vunpack.c.l.b16 %v100
    %v180 = vunpack.c.h.b16 %v100
    %v181 = vunpack.c.l.b16 %v101
    %v182 = vunpack.c.h.b16 %v101
    %v183 = vunpack.c.l.b16 %v102
    %v184 = vunpack.c.h.b16 %v102
    %v185 = vunpack.c.l.b16 %v103
    %v186 = vunpack.c.h.b16 %v103
    %v187 = vunpack.c.l.b16 %v104
    %v188 = vunpack.c.h.b16 %v104
    %v189 = vunpack.c.l.b16 %v105
    %v190 = vunpack.c.h.b16 %v105
    %v191 = vunpack.c.l.b16 %v106
    %v192 = vunpack.c.h.b16 %v106
    %v193 = vunpack.c.l.b16 %v107
    %v194 = vunpack.c.h.b16 %v107
    %v195 = vunpack.c.l.b16 %v108
    %v196 = vunpack.c.h.b16 %v108
    %v197 = vunpack.c.l.b16 %v109
    %v198 = vunpack.c.h.b16 %v109
    %v199 = vunpack.c.l.b16 %v110
    %v200 = vunpack.c.h.b16 %v110
    %v201 = vunpack.c.l.b16 %v111
    %v202 = vunpack.c.h.b16 %v111
    %v203 = vunpack.c.l.b16 %v112
    %v204 = vunpack.c.h.b16 %v112
    %v205 = vunpack.c.l.b16 %v113
    %v206 = vunpack.c.h.b16 %v113
    %v207 = vunpack.c.l.b16 %v114
    %v208 = vunpack.c.h.b16 %v114
    %v209 = vunpack.c.l.b16 %v115
    %v210 = vunpack.c.h.b16 %v115
    %v211 = vunpack.c.l.b16 %v116
    %v212 = vunpack.c.h.b16 %v116
    %v213 = vunpack.c.l.b16 %v117
    %v214 = vunpack.c.h.b16 %v117
    %v215 = vunpack.c.l.b16 %v118
    %v216 = vunpack.c.h.b16 %v118
    %v217 = vunpack.c.l.b16 %v119
    %v218 = vunpack.c.h.b16 %v119
    %v219 = vunpack.c.l.b16 %v120
    %v220 = vunpack.c.h.b16 %v120
    %v221 = vunpack.c.l.b16 %v121
    %v222 = vunpack.c.h.b16 %v121
    %v223 = vunpack.c.l.b16 %v122
    %v224 = vunpack.c.h.b16 %v122
    %v225 = vunpack.c.l.b16 %v123
    %v226 = vunpack.c.h.b16 %v123
    %v227 = vunpack.c.l.b16 %v124
    %v228 = vunpack.c.h.b16 %v124
    %v229 = vunpack.c.l.b16 %v125
    %v230 = vunpack.c.h.b16 %v125
    %v231 = vunpack.c.l.b16 %v126
    %v232 = vunpack.c.h.b16 %v126
    %v233 = vunpack.c.l.b16 %v127
    %v234 = vunpack.c.h.b16 %v127
    %v235 = vunpack.c.l.b16 %v128
    %v236 = vunpack.c.h.b16 %v128
    %v237 = vpack.c.b16 %v177, %v173
    %v238 = vpack.c.b16 %v178, %v174
    %v239 = vpack.c.b16 %v179, %v175
    %v240 = vpack.c.b16 %v180, %v176
    %v241 = vpack.c.b16 %v185, %v181
    %v242 = vpack.c.b16 %v186, %v182
    %v243 = vpack.c.b16 %v187, %v183
    %v244 = vpack.c.b16 %v188, %v184
    %v245 = vpack.c.b16 %v193, %v189
    %v246 = vpack.c.b16 %v194, %v190
    %v247 = vpack.c.b16 %v195, %v191
    %v248 = vpack.c.b16 %v196, %v192
    %v249 = vpack.c.b16 %v201, %v197
    %v250 = vpack.c.b16 %v202, %v198
    %v251 = vpack.c.b16 %v203, %v199
    %v252 = vpack.c.b16 %v204, %v200
    %v253 = vpack.c.b16 %v209, %v205
    %v254 = vpack.c.b16 %v210, %v206
    %v255 = vpack.c.b16 %v211, %v207
    %v256 = vpack.c.b16 %v212, %v208
    %v257 = vpack.c.b16 %v217, %v213
    %v258 = vpack.c.b16 %v218, %v214
    %v259 = vpack.c.b16 %v219, %v215
    %v260 = vpack.c.b16 %v220, %v216
    %v261 = vpack.c.b16 %v225, %v221
    %v262 = vpack.c.b16 %v226, %v222
    %v263 = vpack.c.b16 %v227, %v223
    %v264 = vpack.c.b16 %v228, %v224
    %v265 = vpack.c.b16 %v233, %v229
    %v266 = vpack.c.b16 %v234, %v230
    %v267 = vpack.c.b16 %v235, %v231
    %v268 = vpack.c.b16 %v236, %v232
    %301 = vmatprep.subr.bf16.mxu0 %v266
    %302 = vmatpush1.bf16.msra.mxu0 %v265
    %303 = vmatprep.subr.bf16.mxu0 %v262
    %304 = vmatpush1.bf16.msra.mxu0 %v261
    %305 = vmatprep.subr.bf16.mxu0 %v258
    %306 = vmatpush1.bf16.msra.mxu0 %v257
    %307 = vmatprep.subr.bf16.mxu0 %v254
    %308 = vmatpush1.bf16.msra.mxu0 %v253
    %309 = vmatprep.subr.bf16.mxu0 %v250
    %310 = vmatpush1.bf16.msra.mxu0 %v249
    %311 = vmatprep.subr.bf16.mxu0 %v246
    %312 = vmatpush1.bf16.msra.mxu0 %v245
    %313 = vmatprep.subr.bf16.mxu0 %v242
    %314 = vmatpush1.bf16.msra.mxu0 %v241
    %315 = vmatprep.subr.bf16.mxu0 %v238
    %316 = vmatpush1.bf16.msra.mxu0 %v237
    %317 = vmatprep.subr.bf16.mxu0 0
    %318 = vmatpush2.bf16.msra.mxu0 0
    %319 = vmatprep.subr.bf16.mxu0 0
    %320 = vmatpush2.bf16.msra.mxu0 0
    %321 = vmatprep.subr.bf16.mxu0 0
    %322 = vmatpush2.bf16.msra.mxu0 0
    %323 = vmatprep.subr.bf16.mxu0 0
    %324 = vmatpush2.bf16.msra.mxu0 0
    %325 = vmatprep.subr.bf16.mxu0 0
    %326 = vmatpush2.bf16.msra.mxu0 0
    %327 = vmatprep.subr.bf16.mxu0 0
    %328 = vmatpush2.bf16.msra.mxu0 0
    %329 = vmatprep.subr.bf16.mxu0 0
    %330 = vmatpush2.bf16.msra.mxu0 0
    %331 = vmatprep.subr.bf16.mxu0 0
    %332 = vmatpush2.bf16.msra.mxu0 0
    %333 = vmatprep.mubr.bf16.mxu0 0
    %334 = vmatmul.mubr.bf16.gmra.mxu0 %v137
    %v335 = vpop.f32.mrf.mxu0
    %v336 = vadd.f32 0.0, %v335
    %v337 = vpop.f32.mrf.mxu0
    %v338 = vadd.f32 0.0, %v337
    %v339 = vpop.f32.mrf.mxu0
    %v340 = vadd.f32 0.0, %v339
    %v341 = vpop.f32.mrf.mxu0
    %v342 = vadd.f32 0.0, %v341
    %343 = vmatprep.mubr.bf16.mxu0 0
    %344 = vmatmul.mubr.bf16.gmra.mxu0 %v138
    %v345 = vpop.f32.mrf.mxu0
    %v346 = vadd.f32 0.0, %v345
    %v347 = vpop.f32.mrf.mxu0
    %v348 = vadd.f32 0.0, %v347
    %v349 = vpop.f32.mrf.mxu0
    %v350 = vadd.f32 0.0, %v349
    %v351 = vpop.f32.mrf.mxu0
    %v352 = vadd.f32 0.0, %v351
    %353 = vdwg.mxu0
    %354 = vmatprep.subr.bf16.mxu0 %v268
    %355 = vmatpush1.bf16.msra.mxu0 %v267
    %356 = vmatprep.subr.bf16.mxu0 %v264
    %357 = vmatpush1.bf16.msra.mxu0 %v263
    %358 = vmatprep.subr.bf16.mxu0 %v260
    %359 = vmatpush1.bf16.msra.mxu0 %v259
    %360 = vmatprep.subr.bf16.mxu0 %v256
    %361 = vmatpush1.bf16.msra.mxu0 %v255
    %362 = vmatprep.subr.bf16.mxu0 %v252
    %363 = vmatpush1.bf16.msra.mxu0 %v251
    %364 = vmatprep.subr.bf16.mxu0 %v248
    %365 = vmatpush1.bf16.msra.mxu0 %v247
    %366 = vmatprep.subr.bf16.mxu0 %v244
    %367 = vmatpush1.bf16.msra.mxu0 %v243
    %368 = vmatprep.subr.bf16.mxu0 %v240
    %369 = vmatpush1.bf16.msra.mxu0 %v239
    %370 = vmatprep.subr.bf16.mxu0 0
    %371 = vmatpush2.bf16.msra.mxu0 0
    %372 = vmatprep.subr.bf16.mxu0 0
    %373 = vmatpush2.bf16.msra.mxu0 0
    %374 = vmatprep.subr.bf16.mxu0 0
    %375 = vmatpush2.bf16.msra.mxu0 0
    %376 = vmatprep.subr.bf16.mxu0 0
    %377 = vmatpush2.bf16.msra.mxu0 0
    %378 = vmatprep.subr.bf16.mxu0 0
    %379 = vmatpush2.bf16.msra.mxu0 0
    %380 = vmatprep.subr.bf16.mxu0 0
    %381 = vmatpush2.bf16.msra.mxu0 0
    %382 = vmatprep.subr.bf16.mxu0 0
    %383 = vmatpush2.bf16.msra.mxu0 0
    %384 = vmatprep.subr.bf16.mxu0 0
    %385 = vmatpush2.bf16.msra.mxu0 0
    %386 = vmatprep.mubr.bf16.mxu0 0
    %387 = vmatmul.mubr.bf16.gmra.mxu0 %v137
    %v388 = vpop.f32.mrf.mxu0
    %v389 = vadd.f32 0.0, %v388
    %v390 = vpop.f32.mrf.mxu0
    %v391 = vadd.f32 0.0, %v390
    %v392 = vpop.f32.mrf.mxu0
    %v393 = vadd.f32 0.0, %v392
    %v394 = vpop.f32.mrf.mxu0
    %v395 = vadd.f32 0.0, %v394
    %396 = vmatprep.mubr.bf16.mxu0 0
    %397 = vmatmul.mubr.bf16.gmra.mxu0 %v138
    %v398 = vpop.f32.mrf.mxu0
    %v399 = vadd.f32 0.0, %v398
    %v400 = vpop.f32.mrf.mxu0
    %v401 = vadd.f32 0.0, %v400
    %v402 = vpop.f32.mrf.mxu0
    %v403 = vadd.f32 0.0, %v402
    %v404 = vpop.f32.mrf.mxu0
    %v405 = vadd.f32 0.0, %v404
    %406 = vdwg.mxu0
    %v407 = vld [vmem:[#allocation7] sm:$0xff]
    %v408 = vld [vmem:[#allocation7 + $0x8] sm:$0xff]
    %v409 = vld [vmem:[#allocation7 + $0x10] sm:$0xff]
    %v410 = vld [vmem:[#allocation7 + $0x18] sm:$0xff]
    %v411 = vld [vmem:[#allocation7 + $0x20] sm:$0xff]
    %v412 = vld [vmem:[#allocation7 + $0x28] sm:$0xff]
    %v413 = vld [vmem:[#allocation7 + $0x30] sm:$0xff]
    %v414 = vld [vmem:[#allocation7 + $0x38] sm:$0xff]
    %v415 = vld [vmem:[#allocation8] sm:$0xff]
    %v416 = vld [vmem:[#allocation8 + $0x8] sm:$0xff]
    %v417 = vld [vmem:[#allocation8 + $0x10] sm:$0xff]
    %v418 = vld [vmem:[#allocation8 + $0x18] sm:$0xff]
    %v419 = vld [vmem:[#allocation8 + $0x20] sm:$0xff]
    %v420 = vld [vmem:[#allocation8 + $0x28] sm:$0xff]
    %v421 = vld [vmem:[#allocation8 + $0x30] sm:$0xff]
    %v422 = vld [vmem:[#allocation8 + $0x38] sm:$0xff]
    %v423 = vadd.f32 %v336, %v338
    %v424 = vadd.f32 %v423, %v340
    %v425 = vadd.f32 %v424, %v342
    %v426 = vadd.f32 %v425, %v346
    %v427 = vadd.f32 %v426, %v348
    %v428 = vadd.f32 %v427, %v350
    %v429 = vadd.f32 %v428, %v352
    %430 = vadd.xlane.f32.xlu0 %v429
    %v431 = vpop.xlane.xlu0 %430
    %v432 = vrot.slane %v431, 4
    %v433 = vadd.f32 %v431, %v432
    %v434 = vrot.slane %v433, 2
    %v435 = vadd.f32 %v433, %v434
    %v436 = vrot.slane %v435, 1
    %v437 = vadd.f32 %v435, %v436
    %s438 = vtos %v437
    %v439 = vmul.f32 %v336, %v336
    %v440 = vmul.f32 %v338, %v338
    %v441 = vmul.f32 %v340, %v340
    %v442 = vmul.f32 %v342, %v342
    %v443 = vmul.f32 %v346, %v346
    %v444 = vmul.f32 %v348, %v348
    %v445 = vmul.f32 %v350, %v350
    %v446 = vmul.f32 %v352, %v352
    %v447 = vadd.f32 %v439, %v440
    %v448 = vadd.f32 %v447, %v441
    %v449 = vadd.f32 %v448, %v442
    %v450 = vadd.f32 %v449, %v443
    %v451 = vadd.f32 %v450, %v444
    %v452 = vadd.f32 %v451, %v445
    %v453 = vadd.f32 %v452, %v446
    %454 = vadd.xlane.f32.xlu0 %v453
    %v455 = vpop.xlane.xlu0 %454
    %v456 = vrot.slane %v455, 4
    %v457 = vadd.f32 %v455, %v456
    %v458 = vrot.slane %v457, 2
    %v459 = vadd.f32 %v457, %v458
    %v460 = vrot.slane %v459, 1
    %v461 = vadd.f32 %v459, %v460
    %s462 = vtos %v461
    %s463 = smul.f32 %s438, 0.00012207031
    %s464 = smul.f32 %s462, 0.00012207031
    %s465 = smul.f32 %s463, %s463
    %s466 = ssub.f32 %s464, %s465
    %v467 = vstv %s463
    %v468 = vsub.f32 %v336, %v467
    %v469 = vsub.f32 %v338, %v467
    %v470 = vsub.f32 %v340, %v467
    %v471 = vsub.f32 %v342, %v467
    %v472 = vsub.f32 %v346, %v467
    %v473 = vsub.f32 %v348, %v467
    %v474 = vsub.f32 %v350, %v467
    %v475 = vsub.f32 %v352, %v467
    %s476 = sadd.f32 %s466, 1e-05
    %v477 = vstv %s476
    %v478 = vrsqrt.pop %v477
    %s479 = vtos %v478
    %v480 = vstv %s479
    %v481 = vmul.f32 %v468, %v480
    %v482 = vmul.f32 %v469, %v480
    %v483 = vmul.f32 %v470, %v480
    %v484 = vmul.f32 %v471, %v480
    %v485 = vmul.f32 %v472, %v480
    %v486 = vmul.f32 %v473, %v480
    %v487 = vmul.f32 %v474, %v480
    %v488 = vmul.f32 %v475, %v480
    %v489 = vmul.f32 %v481, %v407
    %v490 = vmul.f32 %v482, %v408
    %v491 = vmul.f32 %v483, %v409
    %v492 = vmul.f32 %v484, %v410
    %v493 = vmul.f32 %v485, %v411
    %v494 = vmul.f32 %v486, %v412
    %v495 = vmul.f32 %v487, %v413
    %v496 = vmul.f32 %v488, %v414
    %v497 = vadd.f32 %v489, %v415
    %v498 = vadd.f32 %v490, %v416
    %v499 = vadd.f32 %v491, %v417
    %v500 = vadd.f32 %v492, %v418
    %v501 = vadd.f32 %v493, %v419
    %v502 = vadd.f32 %v494, %v420
    %v503 = vadd.f32 %v495, %v421
    %v504 = vadd.f32 %v496, %v422
    %v505 = vxor.u32 %v497, 2147483648
    %v506 = vxor.u32 %v498, 2147483648
    %v507 = vmul.f32 %v505, 1.442695
    %v508 = vpow.pop %v507
    %v509 = vmul.f32 %v506, 1.442695
    %v510 = vpow.pop %v509
    %v511 = vadd.f32 %v508, 1.0
    %v512 = vadd.f32 %v510, 1.0
    %v513 = vrcp.pop %v511
    %v514 = vmul.f32 1.0, %v513
    %v515 = vrcp.pop %v512
    %v516 = vmul.f32 1.0, %v515
    %v517 = vxor.u32 %v499, 2147483648
    %v518 = vxor.u32 %v500, 2147483648
    %v519 = vmul.f32 %v517, 1.442695
    %v520 = vpow.pop %v519
    %v521 = vmul.f32 %v518, 1.442695
    %v522 = vpow.pop %v521
    %v523 = vadd.f32 %v520, 1.0
    %v524 = vadd.f32 %v522, 1.0
    %v525 = vrcp.pop %v523
    %v526 = vmul.f32 1.0, %v525
    %v527 = vrcp.pop %v524
    %v528 = vmul.f32 1.0, %v527
    %v529 = vxor.u32 %v501, 2147483648
    %v530 = vxor.u32 %v502, 2147483648
    %v531 = vmul.f32 %v529, 1.442695
    %v532 = vpow.pop %v531
    %v533 = vmul.f32 %v530, 1.442695
    %v534 = vpow.pop %v533
    %v535 = vadd.f32 %v532, 1.0
    %v536 = vadd.f32 %v534, 1.0
    %v537 = vrcp.pop %v535
    %v538 = vmul.f32 1.0, %v537
    %v539 = vrcp.pop %v536
    %v540 = vmul.f32 1.0, %v539
    %v541 = vtanh.pop %v503
    %v542 = vtanh.pop %v504
    %v543 = vld [vmem:[#allocation10] sm:$0xff]
    %v544 = vld [vmem:[#allocation10 + $0x8] sm:$0xff]
    %v545 = vmul.f32 %v526, %v543
    %v546 = vmul.f32 %v528, %v544
    %v547 = vmul.f32 %v514, %v541
    %v548 = vmul.f32 %v516, %v542
    %v549 = vadd.f32 %v545, %v547
    %v550 = vadd.f32 %v546, %v548
    %v551 = vtanh.pop %v549
    %v552 = vtanh.pop %v550
    %v553 = vmul.f32 %v538, %v551
    %v554 = vmul.f32 %v540, %v552
    %555 = vst [vmem:[#allocation12] sm:$0xff] %v549
    %556 = vst [vmem:[#allocation12 + $0x8] sm:$0xff] %v550
    %557 = vst [vmem:[#allocation11] sm:$0xff] %v553
    %558 = vst [vmem:[#allocation11 + $0x8] sm:$0xff] %v554
    %v559 = vadd.f32 %v389, %v391
    %v560 = vadd.f32 %v559, %v393
    %v561 = vadd.f32 %v560, %v395
    %v562 = vadd.f32 %v561, %v399
    %v563 = vadd.f32 %v562, %v401
    %v564 = vadd.f32 %v563, %v403
    %v565 = vadd.f32 %v564, %v405
    %566 = vadd.xlane.f32.xlu0 %v565
    %v567 = vpop.xlane.xlu0 %566
    %v568 = vrot.slane %v567, 4
    %v569 = vadd.f32 %v567, %v568
    %v570 = vrot.slane %v569, 2
    %v571 = vadd.f32 %v569, %v570
    %v572 = vrot.slane %v571, 1
    %v573 = vadd.f32 %v571, %v572
    %s574 = vtos %v573
    %v575 = vmul.f32 %v389, %v389
    %v576 = vmul.f32 %v391, %v391
    %v577 = vmul.f32 %v393, %v393
    %v578 = vmul.f32 %v395, %v395
    %v579 = vmul.f32 %v399, %v399
    %v580 = vmul.f32 %v401, %v401
    %v581 = vmul.f32 %v403, %v403
    %v582 = vmul.f32 %v405, %v405
    %v583 = vadd.f32 %v575, %v576
    %v584 = vadd.f32 %v583, %v577
    %v585 = vadd.f32 %v584, %v578
    %v586 = vadd.f32 %v585, %v579
    %v587 = vadd.f32 %v586, %v580
    %v588 = vadd.f32 %v587, %v581
    %v589 = vadd.f32 %v588, %v582
    %590 = vadd.xlane.f32.xlu0 %v589
    %v591 = vpop.xlane.xlu0 %590
    %v592 = vrot.slane %v591, 4
    %v593 = vadd.f32 %v591, %v592
    %v594 = vrot.slane %v593, 2
    %v595 = vadd.f32 %v593, %v594
    %v596 = vrot.slane %v595, 1
    %v597 = vadd.f32 %v595, %v596
    %s598 = vtos %v597
    %s599 = smul.f32 %s574, 0.00012207031
    %s600 = smul.f32 %s598, 0.00012207031
    %s601 = smul.f32 %s599, %s599
    %s602 = ssub.f32 %s600, %s601
    %v603 = vstv %s599
    %v604 = vsub.f32 %v389, %v603
    %v605 = vsub.f32 %v391, %v603
    %v606 = vsub.f32 %v393, %v603
    %v607 = vsub.f32 %v395, %v603
    %v608 = vsub.f32 %v399, %v603
    %v609 = vsub.f32 %v401, %v603
    %v610 = vsub.f32 %v403, %v603
    %v611 = vsub.f32 %v405, %v603
    %s612 = sadd.f32 %s602, 1e-05
    %v613 = vstv %s612
    %v614 = vrsqrt.pop %v613
    %s615 = vtos %v614
    %v616 = vstv %s615
    %v617 = vmul.f32 %v604, %v616
    %v618 = vmul.f32 %v605, %v616
    %v619 = vmul.f32 %v606, %v616
    %v620 = vmul.f32 %v607, %v616
    %v621 = vmul.f32 %v608, %v616
    %v622 = vmul.f32 %v609, %v616
    %v623 = vmul.f32 %v610, %v616
    %v624 = vmul.f32 %v611, %v616
    %v625 = vmul.f32 %v617, %v407
    %v626 = vmul.f32 %v618, %v408
    %v627 = vmul.f32 %v619, %v409
    %v628 = vmul.f32 %v620, %v410
    %v629 = vmul.f32 %v621, %v411
    %v630 = vmul.f32 %v622, %v412
    %v631 = vmul.f32 %v623, %v413
    %v632 = vmul.f32 %v624, %v414
    %v633 = vadd.f32 %v625, %v415
    %v634 = vadd.f32 %v626, %v416
    %v635 = vadd.f32 %v627, %v417
    %v636 = vadd.f32 %v628, %v418
    %v637 = vadd.f32 %v629, %v419
    %v638 = vadd.f32 %v630, %v420
    %v639 = vadd.f32 %v631, %v421
    %v640 = vadd.f32 %v632, %v422
    %v641 = vxor.u32 %v633, 2147483648
    %v642 = vxor.u32 %v634, 2147483648
    %v643 = vmul.f32 %v641, 1.442695
    %v644 = vpow.pop %v643
    %v645 = vmul.f32 %v642, 1.442695
    %v646 = vpow.pop %v645
    %v647 = vadd.f32 %v644, 1.0
    %v648 = vadd.f32 %v646, 1.0
    %v649 = vrcp.pop %v647
    %v650 = vmul.f32 1.0, %v649
    %v651 = vrcp.pop %v648
    %v652 = vmul.f32 1.0, %v651
    %v653 = vxor.u32 %v635, 2147483648
    %v654 = vxor.u32 %v636, 2147483648
    %v655 = vmul.f32 %v653, 1.442695
    %v656 = vpow.pop %v655
    %v657 = vmul.f32 %v654, 1.442695
    %v658 = vpow.pop %v657
    %v659 = vadd.f32 %v656, 1.0
    %v660 = vadd.f32 %v658, 1.0
    %v661 = vrcp.pop %v659
    %v662 = vmul.f32 1.0, %v661
    %v663 = vrcp.pop %v660
    %v664 = vmul.f32 1.0, %v663
    %v665 = vxor.u32 %v637, 2147483648
    %v666 = vxor.u32 %v638, 2147483648
    %v667 = vmul.f32 %v665, 1.442695
    %v668 = vpow.pop %v667
    %v669 = vmul.f32 %v666, 1.442695
    %v670 = vpow.pop %v669
    %v671 = vadd.f32 %v668, 1.0
    %v672 = vadd.f32 %v670, 1.0
    %v673 = vrcp.pop %v671
    %v674 = vmul.f32 1.0, %v673
    %v675 = vrcp.pop %v672
    %v676 = vmul.f32 1.0, %v675
    %v677 = vtanh.pop %v639
    %v678 = vtanh.pop %v640
    %s679 = scalar_lea.vmem [#allocation10], 16
    %v680 = vld [vmem:[%s679] sm:$0xff]
    %v681 = vld [vmem:[%s679 + $0x8] sm:$0xff]
    %v682 = vmul.f32 %v662, %v680
    %v683 = vmul.f32 %v664, %v681
    %v684 = vmul.f32 %v650, %v677
    %v685 = vmul.f32 %v652, %v678
    %v686 = vadd.f32 %v682, %v684
    %v687 = vadd.f32 %v683, %v685
    %v688 = vtanh.pop %v686
    %v689 = vtanh.pop %v687
    %v690 = vmul.f32 %v674, %v688
    %v691 = vmul.f32 %v676, %v689
    %s692 = scalar_lea.vmem [#allocation12], 16
    %693 = vst [vmem:[%s692] sm:$0xff] %v686
    %694 = vst [vmem:[%s692 + $0x8] sm:$0xff] %v687
    %s695 = scalar_lea.vmem [#allocation11], 16
    %696 = vst [vmem:[%s695] sm:$0xff] %v690
    %697 = vst [vmem:[%s695 + $0x8] sm:$0xff] %v691
    // Predicated region
    $region42: #{tpu_custom_call.1} parent=1 // pred_check
      _
    $region43: #{tpu_custom_call.1} parent=1 // pred_check_branch
      %699 = sbr.rel (0) target = $region45
    $region44: #{tpu_custom_call.1} parent=1 // pred_region
      %s701 = ssub.s32 512, 512
      %702 = vsyncadd [#allocation4], %s701
      %s703 = sshll.u32 [#allocation11], 4
      %s704 = int_to_ptr.vmem [resolvable:$true] %s703
      %709 = dma.vmem_to_hbm [thread:$0]  %s704, 512, %s5, [#allocation4], 256, 256, 16
    $region45: #{tpu_custom_call.1} parent=1 // pred_fallthru
      _
    // Predicated region
    $region46: #{tpu_custom_call.1} parent=1 // pred_check
      _
    $region47: #{tpu_custom_call.1} parent=1 // pred_check_branch
      %711 = sbr.rel (0) target = $region49
    $region48: #{tpu_custom_call.1} parent=1 // pred_region
      %s713 = ssub.s32 512, 512
      %714 = vsyncadd [#allocation13], %s713
      %s715 = sshll.u32 [#allocation12], 4
      %s716 = int_to_ptr.vmem [resolvable:$true] %s715
      %721 = dma.vmem_to_hbm [thread:$0]  %s716, 512, %s6, [#allocation13], 256, 256, 16
    $region49: #{tpu_custom_call.1} parent=1 // pred_fallthru
      _
    // Predicated region
    $region50: #{tpu_custom_call.1} parent=1 // pred_check
      _
    $region51: #{tpu_custom_call.1} parent=1 // pred_check_branch
      %723 = sbr.rel (0) target = $region53
    $region52: #{tpu_custom_call.1} parent=1 // pred_region
      %724 = dma.done [#allocation4], 512
    $region53: #{tpu_custom_call.1} parent=1 // pred_fallthru
      _
    // Predicated region
    $region54: #{tpu_custom_call.1} parent=1 // pred_check
      _
    $region55: #{tpu_custom_call.1} parent=1 // pred_check_branch
      %726 = sbr.rel (0) target = $region57
    $region56: #{tpu_custom_call.1} parent=1 // pred_region
      %727 = dma.done [#allocation13], 512
    $region57: #{tpu_custom_call.1} parent=1 // pred_fallthru
      _
    %728 = vsyncpa [#allocation3], 1
    %729 = vsyncpa [#allocation6], 1
    %730 = vsyncpa [#allocation9], 1
    %731 = vsyncpa [#allocation4], 1
    %732 = vsyncpa [#allocation13], 1

</llo_original>
